<compile_context>
chip_gen: v7x
topology: tpu7x:2x2x1
jax: 0.10.0
libtpu: 0.0.40
codegen_flags: <defaults>
</compile_context>

<pallas_src>
import jax
import jax.numpy as jnp
from jax.experimental import pallas as pl
from jax.experimental.pallas import tpu as pltpu

LANE = 128  # pad classifier output columns to a full lane width


# ---------------------------------------------------------------------------
# Fused kernel: relu(x @ W + b) -> gather rows by `nodes` -> @ Wc_pad + bc_pad
# ---------------------------------------------------------------------------
def fused_kernel(nodes_ref,            # SMEM [M] int32  (scalar prefetch)
                 x_ref,                # VMEM [N, F+E]
                 w_ref,                # VMEM [F+E, H]
                 b_ref,                # VMEM [1, H]
                 wc_ref,               # VMEM [H, LANE]  (zero-padded cols)
                 bc_ref,               # VMEM [1, LANE]  (zero-padded cols)
                 out_ref,              # VMEM [M, LANE]
                 emb_scratch,          # VMEM [N, H]
                 gath_scratch):        # VMEM [M, H]
    N = emb_scratch.shape[0]
    M = gath_scratch.shape[0]

    # --- GNN layer: relu(x @ W + b) for all nodes -------------------------
    emb = jnp.dot(x_ref[...], w_ref[...], preferred_element_type=jnp.float32)
    emb_scratch[...] = jnp.maximum(emb + b_ref[...], 0.0)

    # --- gather selected node rows (SMEM indices + dynamic row slices) ----
    for m in range(M):  # M is small & static; unrolled scalar-indexed copies
        idx = jnp.clip(nodes_ref[m], 0, N - 1)  # match jnp.take clamping
        gath_scratch[pl.ds(m, 1), :] = emb_scratch[pl.ds(idx, 1), :]

    # --- classifier: gathered @ Wc + bc (lane-dense 128-wide output) ------
    out_ref[...] = (jnp.dot(gath_scratch[...], wc_ref[...],
                            preferred_element_type=jnp.float32)
                    + bc_ref[...])


def combined_model_forward(params, features, edge_features, nodes):
    N, F = features.shape
    _, E = edge_features.shape
    H = params["w1"].shape[1]
    C = params["wc"].shape[1]
    M = nodes.shape[0]

    # One-time wrapper-side plumbing (outside the kernel):
    #  - single K=(F+E) contraction instead of two
    #  - lane-dense (128-wide) classifier weights / bias
    x = jnp.concatenate([features, edge_features], axis=1)          # [N, F+E]
    w = jnp.concatenate([params["w1"], params["w2"]], axis=0)       # [F+E, H]
    wc_pad = jnp.zeros((H, LANE), jnp.float32).at[:, :C].set(params["wc"])
    bc_pad = jnp.zeros((1, LANE), jnp.float32).at[:, :C].set(params["bc"])

    K = F + E
    logits_pad = pl.pallas_call(
        fused_kernel,
        out_shape=jax.ShapeDtypeStruct((M, LANE), jnp.float32),
        grid_spec=pltpu.PrefetchScalarGridSpec(
            num_scalar_prefetch=1,                 # `nodes` -> SMEM
            grid=(1,),
            in_specs=[
                pl.BlockSpec((N, K), lambda i, nodes: (0, 0)),
                pl.BlockSpec((K, H), lambda i, nodes: (0, 0)),
                pl.BlockSpec((1, H), lambda i, nodes: (0, 0)),
                pl.BlockSpec((H, LANE), lambda i, nodes: (0, 0)),
                pl.BlockSpec((1, LANE), lambda i, nodes: (0, 0)),
            ],
            out_specs=pl.BlockSpec((M, LANE), lambda i, nodes: (0, 0)),
            scratch_shapes=[
                pltpu.VMEM((N, H), jnp.float32),   # all-node embeddings
                pltpu.VMEM((M, H), jnp.float32),   # gathered rows
            ],
        ),
        compiler_params=pltpu.CompilerParams(
            dimension_semantics=("arbitrary",)),
    )(nodes, x, w, params["b1"], wc_pad, bc_pad)

    return logits_pad[:, :C]


def reference_forward(params, features, edge_features, nodes):
    emb = jnp.maximum(features @ params["w1"] + edge_features @ params["w2"]
                      + params["b1"], 0.0)
    return emb[nodes] @ params["wc"] + params["bc"]


if __name__ == "__main__":
    # Small shapes: N=16 nodes, F=32 node feat dim, E=32 edge feat dim,
    # H=32 hidden, M=8 selected nodes, C=4 classes.
    N, F, E, H, M, C = 16, 32, 32, 32, 8, 4

    key = jax.random.PRNGKey(0)
    k_feat, k_edge, k_w1, k_w2, k_wc, k_nodes = jax.random.split(key, 6)

    features = jax.random.normal(k_feat, (N, F), dtype=jnp.float32)
    edge_features = jax.random.normal(k_edge, (N, E), dtype=jnp.float32)
    nodes = jax.random.randint(k_nodes, (M,), 0, N, dtype=jnp.int32)

    params = {
        "w1": jax.random.normal(k_w1, (F, H), dtype=jnp.float32) * 0.1,
        "w2": jax.random.normal(k_w2, (E, H), dtype=jnp.float32) * 0.1,
        "b1": jnp.zeros((1, H), dtype=jnp.float32),
        "wc": jax.random.normal(k_wc, (H, C), dtype=jnp.float32) * 0.1,
        "bc": jnp.zeros((1, C), dtype=jnp.float32),
    }

    out = combined_model_forward(params, features, edge_features, nodes)
    out = jax.block_until_ready(out)

    ref = reference_forward(params, features, edge_features, nodes)
    assert out.shape == (M, C), out.shape
    assert jnp.allclose(out, ref, atol=1e-5, rtol=1e-5), "mismatch vs reference"

    print("KERNEL_OK")
</pallas_src>

<mosaic_0001>
module attributes {stable_mosaic.version = 11 : i64} {
  func.func @fused_kernel(%arg0: i32, %arg1: memref<8xi32, #tpu.memory_space<smem>>, %arg2: memref<16x64xf32, #tpu.memory_space<vmem>>, %arg3: memref<64x32xf32, #tpu.memory_space<vmem>>, %arg4: memref<1x32xf32, #tpu.memory_space<vmem>>, %arg5: memref<32x128xf32, #tpu.memory_space<vmem>>, %arg6: memref<1x128xf32, #tpu.memory_space<vmem>>, %arg7: memref<8x128xf32, #tpu.memory_space<vmem>>, %arg8: memref<16x32xf32, #tpu.memory_space<vmem>>, %arg9: memref<8x32xf32, #tpu.memory_space<vmem>>) attributes {dimension_semantics = [#tpu.dimension_semantics<arbitrary>], iteration_bounds = array<i64: 1>, scalar_prefetch = 1 : i64, scratch_operands = 2 : i64, tpu.core_type = #tpu.core_type<tc>, window_params = [{pipeline_mode = #tpu.pipeline_mode<synchronous>, transform_indices = @transform_0, window_bounds = array<i64: 16, 64>}, {pipeline_mode = #tpu.pipeline_mode<synchronous>, transform_indices = @transform_1, window_bounds = array<i64: 64, 32>}, {pipeline_mode = #tpu.pipeline_mode<synchronous>, transform_indices = @transform_2, window_bounds = array<i64: 1, 32>}, {pipeline_mode = #tpu.pipeline_mode<synchronous>, transform_indices = @transform_3, window_bounds = array<i64: 32, 128>}, {pipeline_mode = #tpu.pipeline_mode<synchronous>, transform_indices = @transform_4, window_bounds = array<i64: 1, 128>}, {pipeline_mode = #tpu.pipeline_mode<synchronous>, transform_indices = @transform_5, window_bounds = array<i64: 8, 128>}]} {
    %c0 = arith.constant 0 : index
    %c0_0 = arith.constant 0 : index
    %0 = vector.load %arg2[%c0, %c0_0] : memref<16x64xf32, #tpu.memory_space<vmem>>, vector<16x64xf32>
    %c0_1 = arith.constant 0 : index
    %c0_2 = arith.constant 0 : index
    %1 = vector.load %arg3[%c0_1, %c0_2] : memref<64x32xf32, #tpu.memory_space<vmem>>, vector<64x32xf32>
    %cst = arith.constant dense<0.000000e+00> : vector<16x32xf32>
    %2 = tpu.matmul %0, %1, %cst {dimension_numbers = #tpu.dot_dimension_numbers<[1], [0], [0], [1], [0, 0, 1, 1], [], []>} : vector<16x64xf32>, vector<64x32xf32>, vector<16x32xf32> -> vector<16x32xf32>
    %c0_3 = arith.constant 0 : index
    %c0_4 = arith.constant 0 : index
    %3 = vector.load %arg4[%c0_3, %c0_4] : memref<1x32xf32, #tpu.memory_space<vmem>>, vector<1x32xf32>
    %4 = vector.broadcast %3 : vector<1x32xf32> to vector<16x32xf32>
    %5 = arith.addf %2, %4 : vector<16x32xf32>
    %cst_5 = arith.constant 0.000000e+00 : f32
    %6 = vector.broadcast %cst_5 : f32 to vector<16x32xf32>
    %7 = arith.maximumf %5, %6 : vector<16x32xf32>
    %c0_6 = arith.constant 0 : index
    %c0_7 = arith.constant 0 : index
    %8 = vector.load %arg8[%c0_6, %c0_7] : memref<16x32xf32, #tpu.memory_space<vmem>>, vector<16x32xf32>
    tpu.vector_store %arg8[%c0_6, %c0_7], %7 {strides = array<i32>} : memref<16x32xf32, #tpu.memory_space<vmem>>, vector<16x32xf32>,
    %c0_8 = arith.constant 0 : index
    %9 = memref.load %arg1[%c0_8] : memref<8xi32, #tpu.memory_space<smem>>
    %c0_i32 = arith.constant 0 : i32
    %c15_i32 = arith.constant 15 : i32
    %10 = arith.maxsi %c0_i32, %9 : i32
    %11 = arith.minsi %c15_i32, %10 : i32
    %12 = arith.index_cast %11 : i32 to index
    %c0_9 = arith.constant 0 : index
    %13 = vector.load %arg8[%12, %c0_9] : memref<16x32xf32, #tpu.memory_space<vmem>>, vector<1x32xf32>
    %c0_10 = arith.constant 0 : index
    %c0_11 = arith.constant 0 : index
    %14 = vector.load %arg9[%c0_10, %c0_11] : memref<8x32xf32, #tpu.memory_space<vmem>>, vector<1x32xf32>
    tpu.vector_store %arg9[%c0_10, %c0_11], %13 {strides = array<i32>} : memref<8x32xf32, #tpu.memory_space<vmem>>, vector<1x32xf32>,
    %c1 = arith.constant 1 : index
    %15 = memref.load %arg1[%c1] : memref<8xi32, #tpu.memory_space<smem>>
    %c0_i32_12 = arith.constant 0 : i32
    %c15_i32_13 = arith.constant 15 : i32
    %16 = arith.maxsi %c0_i32_12, %15 : i32
    %17 = arith.minsi %c15_i32_13, %16 : i32
    %18 = arith.index_cast %17 : i32 to index
    %c0_14 = arith.constant 0 : index
    %19 = vector.load %arg8[%18, %c0_14] : memref<16x32xf32, #tpu.memory_space<vmem>>, vector<1x32xf32>
    %c1_15 = arith.constant 1 : index
    %c0_16 = arith.constant 0 : index
    %20 = vector.load %arg9[%c1_15, %c0_16] : memref<8x32xf32, #tpu.memory_space<vmem>>, vector<1x32xf32>
    tpu.vector_store %arg9[%c1_15, %c0_16], %19 {strides = array<i32>} : memref<8x32xf32, #tpu.memory_space<vmem>>, vector<1x32xf32>,
    %c2 = arith.constant 2 : index
    %21 = memref.load %arg1[%c2] : memref<8xi32, #tpu.memory_space<smem>>
    %c0_i32_17 = arith.constant 0 : i32
    %c15_i32_18 = arith.constant 15 : i32
    %22 = arith.maxsi %c0_i32_17, %21 : i32
    %23 = arith.minsi %c15_i32_18, %22 : i32
    %24 = arith.index_cast %23 : i32 to index
    %c0_19 = arith.constant 0 : index
    %25 = vector.load %arg8[%24, %c0_19] : memref<16x32xf32, #tpu.memory_space<vmem>>, vector<1x32xf32>
    %c2_20 = arith.constant 2 : index
    %c0_21 = arith.constant 0 : index
    %26 = vector.load %arg9[%c2_20, %c0_21] : memref<8x32xf32, #tpu.memory_space<vmem>>, vector<1x32xf32>
    tpu.vector_store %arg9[%c2_20, %c0_21], %25 {strides = array<i32>} : memref<8x32xf32, #tpu.memory_space<vmem>>, vector<1x32xf32>,
    %c3 = arith.constant 3 : index
    %27 = memref.load %arg1[%c3] : memref<8xi32, #tpu.memory_space<smem>>
    %c0_i32_22 = arith.constant 0 : i32
    %c15_i32_23 = arith.constant 15 : i32
    %28 = arith.maxsi %c0_i32_22, %27 : i32
    %29 = arith.minsi %c15_i32_23, %28 : i32
    %30 = arith.index_cast %29 : i32 to index
    %c0_24 = arith.constant 0 : index
    %31 = vector.load %arg8[%30, %c0_24] : memref<16x32xf32, #tpu.memory_space<vmem>>, vector<1x32xf32>
    %c3_25 = arith.constant 3 : index
    %c0_26 = arith.constant 0 : index
    %32 = vector.load %arg9[%c3_25, %c0_26] : memref<8x32xf32, #tpu.memory_space<vmem>>, vector<1x32xf32>
    tpu.vector_store %arg9[%c3_25, %c0_26], %31 {strides = array<i32>} : memref<8x32xf32, #tpu.memory_space<vmem>>, vector<1x32xf32>,
    %c4 = arith.constant 4 : index
    %33 = memref.load %arg1[%c4] : memref<8xi32, #tpu.memory_space<smem>>
    %c0_i32_27 = arith.constant 0 : i32
    %c15_i32_28 = arith.constant 15 : i32
    %34 = arith.maxsi %c0_i32_27, %33 : i32
    %35 = arith.minsi %c15_i32_28, %34 : i32
    %36 = arith.index_cast %35 : i32 to index
    %c0_29 = arith.constant 0 : index
    %37 = vector.load %arg8[%36, %c0_29] : memref<16x32xf32, #tpu.memory_space<vmem>>, vector<1x32xf32>
    %c4_30 = arith.constant 4 : index
    %c0_31 = arith.constant 0 : index
    %38 = vector.load %arg9[%c4_30, %c0_31] : memref<8x32xf32, #tpu.memory_space<vmem>>, vector<1x32xf32>
    tpu.vector_store %arg9[%c4_30, %c0_31], %37 {strides = array<i32>} : memref<8x32xf32, #tpu.memory_space<vmem>>, vector<1x32xf32>,
    %c5 = arith.constant 5 : index
    %39 = memref.load %arg1[%c5] : memref<8xi32, #tpu.memory_space<smem>>
    %c0_i32_32 = arith.constant 0 : i32
    %c15_i32_33 = arith.constant 15 : i32
    %40 = arith.maxsi %c0_i32_32, %39 : i32
    %41 = arith.minsi %c15_i32_33, %40 : i32
    %42 = arith.index_cast %41 : i32 to index
    %c0_34 = arith.constant 0 : index
    %43 = vector.load %arg8[%42, %c0_34] : memref<16x32xf32, #tpu.memory_space<vmem>>, vector<1x32xf32>
    %c5_35 = arith.constant 5 : index
    %c0_36 = arith.constant 0 : index
    %44 = vector.load %arg9[%c5_35, %c0_36] : memref<8x32xf32, #tpu.memory_space<vmem>>, vector<1x32xf32>
    tpu.vector_store %arg9[%c5_35, %c0_36], %43 {strides = array<i32>} : memref<8x32xf32, #tpu.memory_space<vmem>>, vector<1x32xf32>,
    %c6 = arith.constant 6 : index
    %45 = memref.load %arg1[%c6] : memref<8xi32, #tpu.memory_space<smem>>
    %c0_i32_37 = arith.constant 0 : i32
    %c15_i32_38 = arith.constant 15 : i32
    %46 = arith.maxsi %c0_i32_37, %45 : i32
    %47 = arith.minsi %c15_i32_38, %46 : i32
    %48 = arith.index_cast %47 : i32 to index
    %c0_39 = arith.constant 0 : index
    %49 = vector.load %arg8[%48, %c0_39] : memref<16x32xf32, #tpu.memory_space<vmem>>, vector<1x32xf32>
    %c6_40 = arith.constant 6 : index
    %c0_41 = arith.constant 0 : index
    %50 = vector.load %arg9[%c6_40, %c0_41] : memref<8x32xf32, #tpu.memory_space<vmem>>, vector<1x32xf32>
    tpu.vector_store %arg9[%c6_40, %c0_41], %49 {strides = array<i32>} : memref<8x32xf32, #tpu.memory_space<vmem>>, vector<1x32xf32>,
    %c7 = arith.constant 7 : index
    %51 = memref.load %arg1[%c7] : memref<8xi32, #tpu.memory_space<smem>>
    %c0_i32_42 = arith.constant 0 : i32
    %c15_i32_43 = arith.constant 15 : i32
    %52 = arith.maxsi %c0_i32_42, %51 : i32
    %53 = arith.minsi %c15_i32_43, %52 : i32
    %54 = arith.index_cast %53 : i32 to index
    %c0_44 = arith.constant 0 : index
    %55 = vector.load %arg8[%54, %c0_44] : memref<16x32xf32, #tpu.memory_space<vmem>>, vector<1x32xf32>
    %c7_45 = arith.constant 7 : index
    %c0_46 = arith.constant 0 : index
    %56 = vector.load %arg9[%c7_45, %c0_46] : memref<8x32xf32, #tpu.memory_space<vmem>>, vector<1x32xf32>
    tpu.vector_store %arg9[%c7_45, %c0_46], %55 {strides = array<i32>} : memref<8x32xf32, #tpu.memory_space<vmem>>, vector<1x32xf32>,
    %c0_47 = arith.constant 0 : index
    %c0_48 = arith.constant 0 : index
    %57 = vector.load %arg9[%c0_47, %c0_48] : memref<8x32xf32, #tpu.memory_space<vmem>>, vector<8x32xf32>
    %c0_49 = arith.constant 0 : index
    %c0_50 = arith.constant 0 : index
    %58 = vector.load %arg5[%c0_49, %c0_50] : memref<32x128xf32, #tpu.memory_space<vmem>>, vector<32x128xf32>
    %cst_51 = arith.constant dense<0.000000e+00> : vector<8x128xf32>
    %59 = tpu.matmul %57, %58, %cst_51 {dimension_numbers = #tpu.dot_dimension_numbers<[1], [0], [0], [1], [0, 0, 1, 1], [], []>} : vector<8x32xf32>, vector<32x128xf32>, vector<8x128xf32> -> vector<8x128xf32>
    %c0_52 = arith.constant 0 : index
    %c0_53 = arith.constant 0 : index
    %60 = vector.load %arg6[%c0_52, %c0_53] : memref<1x128xf32, #tpu.memory_space<vmem>>, vector<1x128xf32>
    %61 = vector.broadcast %60 : vector<1x128xf32> to vector<8x128xf32>
    %62 = arith.addf %59, %61 : vector<8x128xf32>
    %c0_54 = arith.constant 0 : index
    %c0_55 = arith.constant 0 : index
    %63 = vector.load %arg7[%c0_54, %c0_55] : memref<8x128xf32, #tpu.memory_space<vmem>>, vector<8x128xf32>
    tpu.vector_store %arg7[%c0_54, %c0_55], %62 {strides = array<i32>} : memref<8x128xf32, #tpu.memory_space<vmem>>, vector<8x128xf32>,
    return
  }
  func.func @transform_0(%arg0: i32, %arg1: memref<8xi32, #tpu.memory_space<smem>>) -> (i32, i32) {
    %c0_i32 = arith.constant 0 : i32
    %c0_i32_0 = arith.constant 0 : i32
    %c0_i32_1 = arith.constant 0 : i32
    return %c0_i32, %c0_i32_0 : i32, i32
  }
  func.func @transform_1(%arg0: i32, %arg1: memref<8xi32, #tpu.memory_space<smem>>) -> (i32, i32) {
    %c0_i32 = arith.constant 0 : i32
    %c0_i32_0 = arith.constant 0 : i32
    %c0_i32_1 = arith.constant 0 : i32
    return %c0_i32, %c0_i32_0 : i32, i32
  }
  func.func @transform_2(%arg0: i32, %arg1: memref<8xi32, #tpu.memory_space<smem>>) -> (i32, i32) {
    %c0_i32 = arith.constant 0 : i32
    %c0_i32_0 = arith.constant 0 : i32
    %c0_i32_1 = arith.constant 0 : i32
    return %c0_i32, %c0_i32_0 : i32, i32
  }
  func.func @transform_3(%arg0: i32, %arg1: memref<8xi32, #tpu.memory_space<smem>>) -> (i32, i32) {
    %c0_i32 = arith.constant 0 : i32
    %c0_i32_0 = arith.constant 0 : i32
    %c0_i32_1 = arith.constant 0 : i32
    return %c0_i32, %c0_i32_0 : i32, i32
  }
  func.func @transform_4(%arg0: i32, %arg1: memref<8xi32, #tpu.memory_space<smem>>) -> (i32, i32) {
    %c0_i32 = arith.constant 0 : i32
    %c0_i32_0 = arith.constant 0 : i32
    %c0_i32_1 = arith.constant 0 : i32
    return %c0_i32, %c0_i32_0 : i32, i32
  }
  func.func @transform_5(%arg0: i32, %arg1: memref<8xi32, #tpu.memory_space<smem>>) -> (i32, i32) {
    %c0_i32 = arith.constant 0 : i32
    %c0_i32_0 = arith.constant 0 : i32
    %c0_i32_1 = arith.constant 0 : i32
    return %c0_i32, %c0_i32_0 : i32, i32
  }
}

</mosaic_0001>

<llo_original>
// kernel: tpu_custom_call.1
$region0: #{tpu_custom_call.1}
  #allocation0 [shape = 'u32[]', space=smem, size = 0x4, offset = 0x4, fixed_abs, tag = 'smem constant byte address 0x4 - core index']
  #allocation1 [shape = 'u32[144,128]{1,0:T(1,128)}', space=vmem, size = 0x12000, scoped, tag = 'internal scratch']
  #allocation2 [shape = 'f32[16,32]{1,0:T(8,128)}', space=vmem, size = 0x2000, scoped, tag = 'scratch operand']
  #allocation3 [shape = 'f32[8,32]{1,0:T(8,128)}', space=vmem, size = 0x1000, scoped, tag = 'scratch operand']
  #allocation4 [shape = 's32[1]{0}', space=sflag, size = 0x4, scoped, tag = 'scoped memory for tpu_custom_call.1']
  #allocation5 [shape = 'u8[512]{0}', space=smem, size = 0x200, scoped, tag = 'prefetched SMEM operand 0']
  %s0 = inlined_call_operand.vmem [shape: s32[8], index: 0, kind: input, shape index: {}]
  %s1 = inlined_call_operand.vmem [shape: f32[16,64], index: 1, kind: input, shape index: {}]
  %s2 = inlined_call_operand.vmem [shape: f32[64,32], index: 2, kind: input, shape index: {}]
  %s3 = inlined_call_operand.vmem [shape: f32[1,32], index: 3, kind: input, shape index: {}]
  %s4 = inlined_call_operand.vmem [shape: f32[32,128], index: 4, kind: input, shape index: {}]
  %s5 = inlined_call_operand.vmem [shape: f32[1,128], index: 5, kind: input, shape index: {}]
  %s6 = inlined_call_operand.hbm [shape: f32[8,128], index: 6, kind: output, shape index: {}]
  %s7 = sld [smem:[#allocation0]]
  $region30: #{tpu_custom_call.1} parent=0
    _
  %s9 = ssub.s32 1, %s7
  %s10 = scalar_select 0, %s9, %s7
  %s11 = sshll.u32 %s0, 4
  %s12 = int_to_ptr.vmem [resolvable:$true] %s11
  %14 = dma.vmem_to_smem %s12, 16, [#allocation5], [#allocation4]
  %15 = dma.done [#allocation4], 16
  %16 = sfence
  $region1: #{tpu_custom_call.1} parent=0
    #allocation6 [shape = 'u8[4096]{0}', space=vmem, size = 0x1000, scoped, tag = 'output window, operand 0, single buffered']
    #allocation7 [shape = 's32[1]{0}', space=sflag, size = 0x4, scoped, tag = 'scoped memory for tpu_custom_call.1']
    %17 = vsyncpa [#allocation7], 0
    // Predicated region
    $region2: #{tpu_custom_call.1} parent=1 // pred_check
      _
    $region3: #{tpu_custom_call.1} parent=1 // pred_check_branch
      %19 = sbr.rel (0) target = $region5
    $region4: #{tpu_custom_call.1} parent=1 // pred_region
      _
    $region5: #{tpu_custom_call.1} parent=1 // pred_fallthru
      _
    // Predicated region
    $region6: #{tpu_custom_call.1} parent=1 // pred_check
      _
    $region7: #{tpu_custom_call.1} parent=1 // pred_check_branch
      %21 = sbr.rel (0) target = $region9
    $region8: #{tpu_custom_call.1} parent=1 // pred_region
      _
    $region9: #{tpu_custom_call.1} parent=1 // pred_fallthru
      _
    // Predicated region
    $region10: #{tpu_custom_call.1} parent=1 // pred_check
      _
    $region11: #{tpu_custom_call.1} parent=1 // pred_check_branch
      %23 = sbr.rel (0) target = $region13
    $region12: #{tpu_custom_call.1} parent=1 // pred_region
      _
    $region13: #{tpu_custom_call.1} parent=1 // pred_fallthru
      _
    // Predicated region
    $region14: #{tpu_custom_call.1} parent=1 // pred_check
      _
    $region15: #{tpu_custom_call.1} parent=1 // pred_check_branch
      %25 = sbr.rel (0) target = $region17
    $region16: #{tpu_custom_call.1} parent=1 // pred_region
      _
    $region17: #{tpu_custom_call.1} parent=1 // pred_fallthru
      _
    // Predicated region
    $region18: #{tpu_custom_call.1} parent=1 // pred_check
      _
    $region19: #{tpu_custom_call.1} parent=1 // pred_check_branch
      %27 = sbr.rel (0) target = $region21
    $region20: #{tpu_custom_call.1} parent=1 // pred_region
      _
    $region21: #{tpu_custom_call.1} parent=1 // pred_fallthru
      _
    %v28 = vld [vmem:[%s1] sm:$0xff]
    %v29 = vld [vmem:[%s1 + $0x8] sm:$0xff]
    %v30 = vld [vmem:[%s2] sm:$0xff]
    %v31 = vld [vmem:[%s2 + $0x8] sm:$0xff]
    %v32 = vld [vmem:[%s2 + $0x10] sm:$0xff]
    %v33 = vld [vmem:[%s2 + $0x18] sm:$0xff]
    %v34 = vld [vmem:[%s2 + $0x20] sm:$0xff]
    %v35 = vld [vmem:[%s2 + $0x28] sm:$0xff]
    %v36 = vld [vmem:[%s2 + $0x30] sm:$0xff]
    %v37 = vld [vmem:[%s2 + $0x38] sm:$0xff]
    %v38 = vld [vmem:[%s3] sm:$0x1]
    %v40 = vlaneseq
    %v41 = vshrl.u32 %v40, 7
    %v42 = vsub.s32 0, %v41
    %v43 = vrot.slane %v38, %v42
    %vm45 = vcmask 523264
    %v47 = vsel %vm45, %v28, 0
    %v50 = vsel %vm45, %v29, 0
    %52 = vmatprep.subr.mxu0 0.0
    %53 = vmatpush1.msra.mxu0 %v30
    %54 = vmatprep.subr.mxu0 0.0
    %55 = vmatpush1.msra.mxu0 %v31
    %56 = vmatprep.subr.mxu0 0.0
    %57 = vmatpush1.msra.mxu0 %v32
    %58 = vmatprep.subr.mxu0 0.0
    %59 = vmatpush1.msra.mxu0 %v33
    %60 = vmatprep.subr.mxu0 0.0
    %61 = vmatpush1.msra.mxu0 %v34
    %62 = vmatprep.subr.mxu0 0.0
    %63 = vmatpush1.msra.mxu0 %v35
    %64 = vmatprep.subr.mxu0 0.0
    %65 = vmatpush1.msra.mxu0 %v36
    %66 = vmatprep.subr.mxu0 0.0
    %67 = vmatpush1.msra.mxu0 %v37
    %68 = vmatprep.subr.mxu0 0.0
    %69 = vmatpush1.msra.mxu0 0.0
    %70 = vmatprep.subr.mxu0 0.0
    %71 = vmatpush1.msra.mxu0 0.0
    %72 = vmatprep.subr.mxu0 0.0
    %73 = vmatpush1.msra.mxu0 0.0
    %74 = vmatprep.subr.mxu0 0.0
    %75 = vmatpush1.msra.mxu0 0.0
    %76 = vmatprep.subr.mxu0 0.0
    %77 = vmatpush1.msra.mxu0 0.0
    %78 = vmatprep.subr.mxu0 0.0
    %79 = vmatpush1.msra.mxu0 0.0
    %80 = vmatprep.subr.mxu0 0.0
    %81 = vmatpush1.msra.mxu0 0.0
    %82 = vmatprep.subr.mxu0 0.0
    %83 = vmatpush1.msra.mxu0 0.0
    %84 = vmatprep.subr.mxu0 0.0
    %85 = vmatpush1.msra.mxu0 0.0
    %86 = vmatprep.subr.mxu0 0.0
    %87 = vmatpush1.msra.mxu0 0.0
    %88 = vmatprep.subr.mxu0 0.0
    %89 = vmatpush1.msra.mxu0 0.0
    %90 = vmatprep.subr.mxu0 0.0
    %91 = vmatpush1.msra.mxu0 0.0
    %92 = vmatprep.subr.mxu0 0.0
    %93 = vmatpush1.msra.mxu0 0.0
    %94 = vmatprep.subr.mxu0 0.0
    %95 = vmatpush1.msra.mxu0 0.0
    %96 = vmatprep.subr.mxu0 0.0
    %97 = vmatpush1.msra.mxu0 0.0
    %98 = vmatprep.subr.mxu0 0.0
    %99 = vmatpush1.msra.mxu0 0.0
    %100 = vmatprep.subr.mxu0 0.0
    %101 = vmatpush1.msra.mxu0 0.0
    %102 = vmatprep.subr.mxu0 0.0
    %103 = vmatpush1.msra.mxu0 0.0
    %104 = vmatprep.subr.mxu0 0.0
    %105 = vmatpush1.msra.mxu0 0.0
    %106 = vmatprep.subr.mxu0 0.0
    %107 = vmatpush1.msra.mxu0 0.0
    %108 = vmatprep.subr.mxu0 0.0
    %109 = vmatpush1.msra.mxu0 0.0
    %110 = vmatprep.subr.mxu0 0.0
    %111 = vmatpush1.msra.mxu0 0.0
    %112 = vmatprep.subr.mxu0 0.0
    %113 = vmatpush1.msra.mxu0 0.0
    %114 = vmatprep.subr.mxu0 0.0
    %115 = vmatpush1.msra.mxu0 0.0
    %116 = vmatprep.mubr.f32.mxu0 0.0
    %117 = vmatmul.mubr.f32.gmra.mrb[0].mxu0 %v47
    %v118 = vpop.f32.mrb[0].mxu0
    %v119 = vadd.f32 %v43, %v118
    %v120 = vpop.f32.mrb[0].mxu0
    %121 = vmatprep.mubr.f32.mxu0 0.0
    %122 = vmatmul.mubr.f32.gmra.mrb[0].mxu0 %v50
    %v123 = vpop.f32.mrb[0].mxu0
    %v124 = vadd.f32 %v43, %v123
    %v125 = vpop.f32.mrb[0].mxu0
    %126 = vdwg.mxu0
    %v127 = vmax.f32 %v119, 0.0
    %v128 = vmax.f32 %v124, 0.0
    %vm129 = vcmask 261120
    %130 = vst.msk [vmem:[#allocation2] sm:$0xff] %vm129, %v127
    %131 = vst.msk [vmem:[#allocation2 + $0x8] sm:$0xff] %vm129, %v128
    %s132 = sld [smem:[#allocation5]]
    %p133 = scmp.gt.s32.totalorder %s132, 0
    %s134 = scalar_select %p133, %s132, 0
    %p135 = scmp.lt.s32.totalorder %s134, 15
    %s136 = scalar_select %p135, %s134, 15
    %s137 = scalar_lea.vmem [#allocation2], %s136
    %v138 = vld [vmem:[%s137] sm:$0x1]
    %vm139 = vcmask 253952
    %140 = vst.msk [vmem:[#allocation3] sm:$0x1] %vm139, %v138
    %s141 = sld [smem:[#allocation5 + $0x1]]
    %p142 = scmp.gt.s32.totalorder %s141, 0
    %s143 = scalar_select %p142, %s141, 0
    %p144 = scmp.lt.s32.totalorder %s143, 15
    %s145 = scalar_select %p144, %s143, 15
    %s146 = scalar_lea.vmem [#allocation2], %s145
    %v147 = vld [vmem:[%s146] sm:$0x1]
    %148 = vst.msk [vmem:[#allocation3 + $0x1] sm:$0x1] %vm139, %v147
    %s149 = sld [smem:[#allocation5 + $0x2]]
    %p150 = scmp.gt.s32.totalorder %s149, 0
    %s151 = scalar_select %p150, %s149, 0
    %p152 = scmp.lt.s32.totalorder %s151, 15
    %s153 = scalar_select %p152, %s151, 15
    %s154 = scalar_lea.vmem [#allocation2], %s153
    %v155 = vld [vmem:[%s154] sm:$0x1]
    %156 = vst.msk [vmem:[#allocation3 + $0x2] sm:$0x1] %vm139, %v155
    %s157 = sld [smem:[#allocation5 + $0x3]]
    %p158 = scmp.gt.s32.totalorder %s157, 0
    %s159 = scalar_select %p158, %s157, 0
    %p160 = scmp.lt.s32.totalorder %s159, 15
    %s161 = scalar_select %p160, %s159, 15
    %s162 = scalar_lea.vmem [#allocation2], %s161
    %v163 = vld [vmem:[%s162] sm:$0x1]
    %164 = vst.msk [vmem:[#allocation3 + $0x3] sm:$0x1] %vm139, %v163
    %s165 = sld [smem:[#allocation5 + $0x4]]
    %p166 = scmp.gt.s32.totalorder %s165, 0
    %s167 = scalar_select %p166, %s165, 0
    %p168 = scmp.lt.s32.totalorder %s167, 15
    %s169 = scalar_select %p168, %s167, 15
    %s170 = scalar_lea.vmem [#allocation2], %s169
    %v171 = vld [vmem:[%s170] sm:$0x1]
    %172 = vst.msk [vmem:[#allocation3 + $0x4] sm:$0x1] %vm139, %v171
    %s173 = sld [smem:[#allocation5 + $0x5]]
    %p174 = scmp.gt.s32.totalorder %s173, 0
    %s175 = scalar_select %p174, %s173, 0
    %p176 = scmp.lt.s32.totalorder %s175, 15
    %s177 = scalar_select %p176, %s175, 15
    %s178 = scalar_lea.vmem [#allocation2], %s177
    %v179 = vld [vmem:[%s178] sm:$0x1]
    %180 = vst.msk [vmem:[#allocation3 + $0x5] sm:$0x1] %vm139, %v179
    %s181 = sld [smem:[#allocation5 + $0x6]]
    %p182 = scmp.gt.s32.totalorder %s181, 0
    %s183 = scalar_select %p182, %s181, 0
    %p184 = scmp.lt.s32.totalorder %s183, 15
    %s185 = scalar_select %p184, %s183, 15
    %s186 = scalar_lea.vmem [#allocation2], %s185
    %v187 = vld [vmem:[%s186] sm:$0x1]
    %188 = vst.msk [vmem:[#allocation3 + $0x6] sm:$0x1] %vm139, %v187
    %s189 = sld [smem:[#allocation5 + $0x7]]
    %p190 = scmp.gt.s32.totalorder %s189, 0
    %s191 = scalar_select %p190, %s189, 0
    %p192 = scmp.lt.s32.totalorder %s191, 15
    %s193 = scalar_select %p192, %s191, 15
    %s194 = scalar_lea.vmem [#allocation2], %s193
    %v195 = vld [vmem:[%s194] sm:$0x1]
    %196 = vst.msk [vmem:[#allocation3 + $0x7] sm:$0x1] %vm139, %v195
    %v197 = vld [vmem:[#allocation3] sm:$0xff]
    %v198 = vld [vmem:[%s4] sm:$0xff]
    %v199 = vld [vmem:[%s4 + $0x8] sm:$0xff]
    %v200 = vld [vmem:[%s4 + $0x10] sm:$0xff]
    %v201 = vld [vmem:[%s4 + $0x18] sm:$0xff]
    %v202 = vld [vmem:[%s5] sm:$0x1]
    %v204 = vlaneseq
    %v205 = vshrl.u32 %v204, 7
    %v206 = vsub.s32 0, %v205
    %v207 = vrot.slane %v202, %v206
    %v210 = vsel %vm129, %v197, 0
    %212 = vmatprep.subr.mxu0 0.0
    %213 = vmatpush1.msra.mxu0 %v198
    %214 = vmatprep.subr.mxu0 0.0
    %215 = vmatpush1.msra.mxu0 %v199
    %216 = vmatprep.subr.mxu0 0.0
    %217 = vmatpush1.msra.mxu0 %v200
    %218 = vmatprep.subr.mxu0 0.0
    %219 = vmatpush1.msra.mxu0 %v201
    %220 = vmatprep.subr.mxu0 0.0
    %221 = vmatpush1.msra.mxu0 0.0
    %222 = vmatprep.subr.mxu0 0.0
    %223 = vmatpush1.msra.mxu0 0.0
    %224 = vmatprep.subr.mxu0 0.0
    %225 = vmatpush1.msra.mxu0 0.0
    %226 = vmatprep.subr.mxu0 0.0
    %227 = vmatpush1.msra.mxu0 0.0
    %228 = vmatprep.subr.mxu0 0.0
    %229 = vmatpush1.msra.mxu0 0.0
    %230 = vmatprep.subr.mxu0 0.0
    %231 = vmatpush1.msra.mxu0 0.0
    %232 = vmatprep.subr.mxu0 0.0
    %233 = vmatpush1.msra.mxu0 0.0
    %234 = vmatprep.subr.mxu0 0.0
    %235 = vmatpush1.msra.mxu0 0.0
    %236 = vmatprep.subr.mxu0 0.0
    %237 = vmatpush1.msra.mxu0 0.0
    %238 = vmatprep.subr.mxu0 0.0
    %239 = vmatpush1.msra.mxu0 0.0
    %240 = vmatprep.subr.mxu0 0.0
    %241 = vmatpush1.msra.mxu0 0.0
    %242 = vmatprep.subr.mxu0 0.0
    %243 = vmatpush1.msra.mxu0 0.0
    %244 = vmatprep.subr.mxu0 0.0
    %245 = vmatpush1.msra.mxu0 0.0
    %246 = vmatprep.subr.mxu0 0.0
    %247 = vmatpush1.msra.mxu0 0.0
    %248 = vmatprep.subr.mxu0 0.0
    %249 = vmatpush1.msra.mxu0 0.0
    %250 = vmatprep.subr.mxu0 0.0
    %251 = vmatpush1.msra.mxu0 0.0
    %252 = vmatprep.subr.mxu0 0.0
    %253 = vmatpush1.msra.mxu0 0.0
    %254 = vmatprep.subr.mxu0 0.0
    %255 = vmatpush1.msra.mxu0 0.0
    %256 = vmatprep.subr.mxu0 0.0
    %257 = vmatpush1.msra.mxu0 0.0
    %258 = vmatprep.subr.mxu0 0.0
    %259 = vmatpush1.msra.mxu0 0.0
    %260 = vmatprep.subr.mxu0 0.0
    %261 = vmatpush1.msra.mxu0 0.0
    %262 = vmatprep.subr.mxu0 0.0
    %263 = vmatpush1.msra.mxu0 0.0
    %264 = vmatprep.subr.mxu0 0.0
    %265 = vmatpush1.msra.mxu0 0.0
    %266 = vmatprep.subr.mxu0 0.0
    %267 = vmatpush1.msra.mxu0 0.0
    %268 = vmatprep.subr.mxu0 0.0
    %269 = vmatpush1.msra.mxu0 0.0
    %270 = vmatprep.subr.mxu0 0.0
    %271 = vmatpush1.msra.mxu0 0.0
    %272 = vmatprep.subr.mxu0 0.0
    %273 = vmatpush1.msra.mxu0 0.0
    %274 = vmatprep.subr.mxu0 0.0
    %275 = vmatpush1.msra.mxu0 0.0
    %276 = vmatprep.mubr.f32.mxu0 0.0
    %277 = vmatmul.mubr.f32.gmra.mrb[0].mxu0 %v210
    %v278 = vpop.f32.mrb[0].mxu0
    %v279 = vadd.f32 %v207, %v278
    %v280 = vpop.f32.mrb[0].mxu0
    %281 = vdwg.mxu0
    %282 = vst [vmem:[#allocation6] sm:$0xff] %v279
    // Predicated region
    $region22: #{tpu_custom_call.1} parent=1 // pred_check
      _
    $region23: #{tpu_custom_call.1} parent=1 // pred_check_branch
      %284 = sbr.rel (0) target = $region25
    $region24: #{tpu_custom_call.1} parent=1 // pred_region
      %s286 = ssub.s32 128, 128
      %287 = vsyncadd [#allocation7], %s286
      %s289 = sshll.u32 [#allocation6], 4
      %s290 = int_to_ptr.vmem [resolvable:$true] %s289
      %292 = dma.vmem_to_hbm [thread:$0]  %s290, 128, %s6, [#allocation7]
    $region25: #{tpu_custom_call.1} parent=1 // pred_fallthru
      _
    // Predicated region
    $region26: #{tpu_custom_call.1} parent=1 // pred_check
      _
    $region27: #{tpu_custom_call.1} parent=1 // pred_check_branch
      %294 = sbr.rel (0) target = $region29
    $region28: #{tpu_custom_call.1} parent=1 // pred_region
      %295 = dma.done [#allocation7], 128
    $region29: #{tpu_custom_call.1} parent=1 // pred_fallthru
      _
    %296 = vsyncpa [#allocation7], 1

</llo_original>
